<compile_context>
chip_gen: v7x
topology: tpu7x:2x2x1
jax: 0.10.0
libtpu: 0.0.40
codegen_flags: <defaults>
</compile_context>

<pallas_src>
import math

import jax
import jax.numpy as jnp
from jax import lax
from jax.experimental import pallas as pl
from jax.experimental.pallas import tpu as pltpu


# ---------------------------------------------------------------------------
# Tiling helpers
# ---------------------------------------------------------------------------

_TM_TARGET = 512   # sublane-axis tile (rows of X)
_TN_TARGET = 512   # lane-axis tile (cols of output / rows of Y)
_VMEM_WS_BUDGET = 20 * 2**20   # double-buffered working-set budget (v7x-safe)


def _round_up(x, m):
    return ((x + m - 1) // m) * m


def _working_set_bytes(tm, tn, d):
    # Double-buffered f32 tiles: X (tm,d), Yt (d,tn), xx (tm,1 lane-padded),
    # yy (1,tn sublane-padded), out (tm,tn).
    return 2 * 4 * (tm * d + tn * d + tm * 128 + 8 * tn + tm * tn)


def _tile_plan(n, m, d):
    """D-aware (tm, tn) on the (8,128) grain, working set within VMEM budget."""
    tm = min(_TM_TARGET, _round_up(n, 8))
    tn = min(_TN_TARGET, _round_up(m, 128))
    while _working_set_bytes(tm, tn, d) > _VMEM_WS_BUDGET:
        if tm > 8 and (tm >= tn or tn <= 128):
            tm = _round_up(tm // 2, 8)
        elif tn > 128:
            tn = _round_up(tn // 2, 128)
        else:
            break
    # TODO(synk): for very large D the better fix is a third "arbitrary" grid
    # axis over D with a VMEM f32 accumulator (init/finalize via pl.when)
    # instead of shrinking tm/tn.
    # v7x megacore: make sure at least one parallel axis has >= 2 tiles.
    if pl.cdiv(n, tm) == 1 and pl.cdiv(m, tn) == 1:
        if m > 128:
            tn = _round_up(pl.cdiv(m, 2), 128)
        elif n > 8:
            tm = _round_up(pl.cdiv(n, 2), 8)
    return tm, tn


def _grid_and_specs(n, m, d, tm, tn):
    """Grid (order chosen to minimize redundant operand refetch) + BlockSpecs."""
    gi, gj = pl.cdiv(n, tm), pl.cdiv(m, tn)
    # Redundant traffic = (outer_count - 1) * bytes(inner-varying operand).
    row_outer = (gi - 1) * m <= (gj - 1) * n
    if row_outer:
        grid = (gi, gj)
        x_map = lambda i, j: (i, 0)
        y_map = lambda i, j: (0, j)
        o_map = lambda i, j: (i, j)
    else:
        grid = (gj, gi)
        x_map = lambda j, i: (i, 0)
        y_map = lambda j, i: (0, j)
        o_map = lambda j, i: (i, j)
    in_specs = [
        pl.BlockSpec((tm, d), x_map),     # X tile        (tm, D)
        pl.BlockSpec((d, tn), y_map),     # Y^T tile      (D, tn)  canonical MXU RHS
        pl.BlockSpec((tm, 1), x_map),     # xx tile       (tm, 1)
        pl.BlockSpec((1, tn), y_map),     # yy tile       (1, tn)
    ]
    out_spec = pl.BlockSpec((tm, tn), o_map)
    return grid, in_specs, out_spec


def _compiler_params(tm, tn, d):
    ws = _working_set_bytes(tm, tn, d)
    vmem_limit = max(32 * 2**20, min(48 * 2**20, int(1.5 * ws)))
    return pltpu.CompilerParams(
        dimension_semantics=("parallel", "parallel"),
        vmem_limit_bytes=vmem_limit,
    )


# ---------------------------------------------------------------------------
# Kernels
# ---------------------------------------------------------------------------

def _fused_rbf_kernel(gamma_ref, x_ref, yt_ref, xx_ref, yy_ref, o_ref):
    # gamma_ref: (1,1) SMEM; x_ref: (tm,D); yt_ref: (D,tn); xx: (tm,1); yy: (1,tn)
    gamma = gamma_ref[0, 0]                             # scalar read, once per tile
    xy = lax.dot_general(
        x_ref[...], yt_ref[...], (((1,), (0,)), ((), ())),
        preferred_element_type=jnp.float32)             # MXU, canonical layout
    d2 = xx_ref[...] + yy_ref[...] - 2.0 * xy           # VPU broadcast adds
    o_ref[...] = jnp.exp(-gamma * d2)                   # EUP exp, fused


def _dnorm2_kernel(x_ref, yt_ref, xx_ref, yy_ref, o_ref):
    xy = lax.dot_general(
        x_ref[...], yt_ref[...], (((1,), (0,)), ((), ())),
        preferred_element_type=jnp.float32)
    o_ref[...] = xx_ref[...] + yy_ref[...] - 2.0 * xy


def _exp_kernel(gamma_ref, d_ref, o_ref):
    o_ref[...] = jnp.exp(-gamma_ref[0, 0] * d_ref[...])


# ---------------------------------------------------------------------------
# pallas_call wrappers
# ---------------------------------------------------------------------------

def _fused_rbf(X, Yt, xx, yy, gamma, tm, tn):
    n, d = X.shape
    m = Yt.shape[1]
    grid, in_specs, out_spec = _grid_and_specs(n, m, d, tm, tn)
    gamma_arr = jnp.reshape(gamma.astype(jnp.float32), (1, 1))
    return pl.pallas_call(
        _fused_rbf_kernel,
        out_shape=jax.ShapeDtypeStruct((n, m), jnp.float32),
        grid=grid,
        in_specs=[pl.BlockSpec(memory_space=pltpu.MemorySpace.SMEM)] + in_specs,
        out_specs=out_spec,
        compiler_params=_compiler_params(tm, tn, d),
        cost_estimate=pl.CostEstimate(
            flops=2 * n * m * d + 4 * n * m,
            transcendentals=n * m,
            bytes_accessed=4 * (n * d + m * d + n + m + n * m)),
    )(gamma_arr, X, Yt, xx, yy)


def _pairwise_sq_dists(X, Yt, xx, yy, tm, tn):
    n, d = X.shape
    m = Yt.shape[1]
    grid, in_specs, out_spec = _grid_and_specs(n, m, d, tm, tn)
    return pl.pallas_call(
        _dnorm2_kernel,
        out_shape=jax.ShapeDtypeStruct((n, m), jnp.float32),
        grid=grid,
        in_specs=in_specs,
        out_specs=out_spec,
        compiler_params=_compiler_params(tm, tn, d),
        cost_estimate=pl.CostEstimate(
            flops=2 * n * m * d + 3 * n * m,
            transcendentals=0,
            bytes_accessed=4 * (n * d + m * d + n + m + n * m)),
    )(X, Yt, xx, yy)


def _rbf_exp_inplace(dnorm2, gamma):
    # Pure streaming read+write pass: use large tiles (~85% of HBM roofline).
    n, m = dnorm2.shape
    tm = min(512, _round_up(n, 8))
    tn = min(1024, _round_up(m, 128))
    gamma_arr = jnp.reshape(gamma.astype(jnp.float32), (1, 1))
    return pl.pallas_call(
        _exp_kernel,
        out_shape=jax.ShapeDtypeStruct((n, m), jnp.float32),
        grid=(pl.cdiv(n, tm), pl.cdiv(m, tn)),
        in_specs=[
            pl.BlockSpec(memory_space=pltpu.MemorySpace.SMEM),   # gamma
            pl.BlockSpec((tm, tn), lambda i, j: (i, j)),         # dnorm2 tile
        ],
        out_specs=pl.BlockSpec((tm, tn), lambda i, j: (i, j)),
        input_output_aliases={1: 0},          # exp in place, no extra NxM buffer
        compiler_params=pltpu.CompilerParams(
            dimension_semantics=("parallel", "parallel"),
            vmem_limit_bytes=32 * 2**20),
        cost_estimate=pl.CostEstimate(
            flops=n * m, transcendentals=n * m, bytes_accessed=8 * n * m),
    )(gamma_arr, dnorm2)


# ---------------------------------------------------------------------------
# Forward implementations
# ---------------------------------------------------------------------------

def _prepare(X, Y):
    """Transpose Y once and precompute row norms (hoisted out of the grid)."""
    n, d = X.shape
    m, _ = Y.shape
    tm, tn = _tile_plan(n, m, d)
    Yt = Y.T                                               # (D, M) canonical RHS
    xx = jnp.sum(X * X, axis=-1, keepdims=True)            # (N, 1)
    yy = jnp.sum(Y * Y, axis=-1).reshape(1, m)             # (1, M)
    return Yt, xx, yy, tm, tn


@jax.jit
def _rbf_fixed_sigma(X, Y, gamma):
    Yt, xx, yy, tm, tn = _prepare(X, Y)
    return _fused_rbf(X, Yt, xx, yy, gamma, tm, tn)


@jax.jit
def _rbf_median_sigma(X, Y):
    n = X.shape[0]
    Yt, xx, yy, tm, tn = _prepare(X, Y)
    dnorm2 = _pairwise_sq_dists(X, Yt, xx, yy, tm, tn)     # exactly (N, M)
    # TODO(synk): median (global selection/sort) has no clean Pallas
    # equivalent; computed with jnp.median, mirroring torch's np.median.
    h = jnp.median(dnorm2) / (2.0 * math.log(n + 1))
    sigma = jnp.sqrt(h)
    gamma = 1.0 / (1e-08 + 2.0 * sigma ** 2)
    return _rbf_exp_inplace(dnorm2, gamma)


class RBF:
    """JAX/Pallas port of the PyTorch RBF module (no trainable parameters)."""

    def __init__(self, sigma=None):
        self.sigma = sigma

    def __call__(self, X, Y):
        X = jnp.asarray(X, dtype=jnp.float32)
        Y = jnp.asarray(Y, dtype=jnp.float32)
        if self.sigma is None:
            return _rbf_median_sigma(X, Y)
        sigma = jnp.asarray(self.sigma, dtype=jnp.float32)
        gamma = 1.0 / (1e-08 + 2.0 * sigma ** 2)
        return _rbf_fixed_sigma(X, Y, gamma)


# ---------------------------------------------------------------------------
# Pure-JAX reference + self-test
# ---------------------------------------------------------------------------

def _reference(X, Y, sigma=None):
    XY = jnp.dot(X, Y.T, precision=lax.Precision.HIGHEST)
    xx = jnp.sum(X * X, axis=-1)
    yy = jnp.sum(Y * Y, axis=-1)
    dnorm2 = -2.0 * XY + xx[:, None] + yy[None, :]
    if sigma is None:
        h = jnp.median(dnorm2) / (2.0 * math.log(X.shape[0] + 1))
        sigma = jnp.sqrt(h)
    gamma = 1.0 / (1e-08 + 2.0 * jnp.asarray(sigma, jnp.float32) ** 2)
    return jnp.exp(-gamma * dnorm2)


if __name__ == "__main__":
    key = jax.random.PRNGKey(0)
    kx, ky, kx2, ky2 = jax.random.split(key, 4)

    # Small demo shape (single lane tile, split over rows for megacore).
    N, M, D = 16, 16, 32
    X = jax.random.normal(kx, (N, D), dtype=jnp.float32)
    Y = jax.random.normal(ky, (M, D), dtype=jnp.float32)

    K = RBF(sigma=None)(X, Y)
    jax.block_until_ready(K)
    assert K.shape == (N, M)
    assert jnp.allclose(K, _reference(X, Y, None), atol=1e-4, rtol=1e-4)

    K2 = RBF(sigma=6.0)(X, Y)
    jax.block_until_ready(K2)
    assert jnp.allclose(K2, _reference(X, Y, 6.0), atol=1e-4, rtol=1e-4)

    # Non-aligned shape: exercises boundary masking and a multi-tile grid.
    N2, M2, D2 = 300, 600, 64
    X2 = jax.random.normal(kx2, (N2, D2), dtype=jnp.float32)
    Y2 = jax.random.normal(ky2, (M2, D2), dtype=jnp.float32)

    K3 = RBF(sigma=None)(X2, Y2)
    jax.block_until_ready(K3)
    assert K3.shape == (N2, M2)
    assert jnp.allclose(K3, _reference(X2, Y2, None), atol=1e-4, rtol=1e-4)

    K4 = RBF(sigma=8.0)(X2, Y2)
    jax.block_until_ready(K4)
    assert jnp.allclose(K4, _reference(X2, Y2, 8.0), atol=1e-4, rtol=1e-4)

    print("KERNEL_OK")
</pallas_src>

<mosaic_0001>
module attributes {stable_mosaic.version = 11 : i64} {
  func.func @_dnorm2_kernel(%arg0: i32, %arg1: i32, %arg2: memref<8x32xf32, #tpu.memory_space<vmem>>, %arg3: memref<32x128xf32, #tpu.memory_space<vmem>>, %arg4: memref<8x1xf32, #tpu.memory_space<vmem>>, %arg5: memref<1x128xf32, #tpu.memory_space<vmem>>, %arg6: memref<8x128xf32, #tpu.memory_space<vmem>>) attributes {dimension_semantics = [#tpu.dimension_semantics<parallel>, #tpu.dimension_semantics<parallel>], iteration_bounds = array<i64: 1, 2>, scalar_prefetch = 0 : i64, scratch_operands = 0 : i64, tpu.core_type = #tpu.core_type<tc>, window_params = [{transform_indices = @transform_0, window_bounds = array<i64: 8, 32>}, {transform_indices = @transform_1, window_bounds = array<i64: 32, 128>}, {transform_indices = @transform_2, window_bounds = array<i64: 8, 1>}, {transform_indices = @transform_3, window_bounds = array<i64: 1, 128>}, {transform_indices = @transform_4, window_bounds = array<i64: 8, 128>}]} {
    %c0 = arith.constant 0 : index
    %c0_0 = arith.constant 0 : index
    %0 = vector.load %arg2[%c0, %c0_0] : memref<8x32xf32, #tpu.memory_space<vmem>>, vector<8x32xf32>
    %c0_1 = arith.constant 0 : index
    %c0_2 = arith.constant 0 : index
    %1 = vector.load %arg3[%c0_1, %c0_2] : memref<32x128xf32, #tpu.memory_space<vmem>>, vector<32x128xf32>
    %cst = arith.constant dense<0.000000e+00> : vector<8x128xf32>
    %2 = tpu.matmul %0, %1, %cst {dimension_numbers = #tpu.dot_dimension_numbers<[1], [0], [0], [1], [0, 0, 1, 1], [], []>} : vector<8x32xf32>, vector<32x128xf32>, vector<8x128xf32> -> vector<8x128xf32>
    %c0_3 = arith.constant 0 : index
    %c0_4 = arith.constant 0 : index
    %3 = vector.load %arg4[%c0_3, %c0_4] : memref<8x1xf32, #tpu.memory_space<vmem>>, vector<8x1xf32>
    %c0_5 = arith.constant 0 : index
    %c0_6 = arith.constant 0 : index
    %4 = vector.load %arg5[%c0_5, %c0_6] : memref<1x128xf32, #tpu.memory_space<vmem>>, vector<1x128xf32>
    %5 = vector.broadcast %3 : vector<8x1xf32> to vector<8x128xf32>
    %6 = vector.broadcast %4 : vector<1x128xf32> to vector<8x128xf32>
    %7 = arith.addf %5, %6 : vector<8x128xf32>
    %cst_7 = arith.constant 2.000000e+00 : f32
    %8 = vector.broadcast %cst_7 : f32 to vector<8x128xf32>
    %9 = arith.mulf %8, %2 : vector<8x128xf32>
    %10 = arith.subf %7, %9 : vector<8x128xf32>
    %c0_8 = arith.constant 0 : index
    %c0_9 = arith.constant 0 : index
    %11 = vector.load %arg6[%c0_8, %c0_9] : memref<8x128xf32, #tpu.memory_space<vmem>>, vector<8x128xf32>
    tpu.vector_store %arg6[%c0_8, %c0_9], %10 {strides = array<i32>} : memref<8x128xf32, #tpu.memory_space<vmem>>, vector<8x128xf32>,
    return
  }
  func.func @transform_0(%arg0: i32, %arg1: i32) -> (i32, i32) {
    %c0_i32 = arith.constant 0 : i32
    %c0_i32_0 = arith.constant 0 : i32
    return %arg1, %c0_i32 : i32, i32
  }
  func.func @transform_1(%arg0: i32, %arg1: i32) -> (i32, i32) {
    %c0_i32 = arith.constant 0 : i32
    %c0_i32_0 = arith.constant 0 : i32
    return %c0_i32, %arg0 : i32, i32
  }
  func.func @transform_2(%arg0: i32, %arg1: i32) -> (i32, i32) {
    %c0_i32 = arith.constant 0 : i32
    %c0_i32_0 = arith.constant 0 : i32
    return %arg1, %c0_i32 : i32, i32
  }
  func.func @transform_3(%arg0: i32, %arg1: i32) -> (i32, i32) {
    %c0_i32 = arith.constant 0 : i32
    %c0_i32_0 = arith.constant 0 : i32
    return %c0_i32, %arg0 : i32, i32
  }
  func.func @transform_4(%arg0: i32, %arg1: i32) -> (i32, i32) {
    %c0_i32 = arith.constant 0 : i32
    return %arg1, %arg0 : i32, i32
  }
}

module attributes {stable_mosaic.version = 11 : i64} {
  func.func @_exp_kernel(%arg0: i32, %arg1: i32, %arg2: memref<1x1xf32, #tpu.memory_space<smem>>, %arg3: memref<16x128xf32, #tpu.memory_space<vmem>>, %arg4: memref<16x128xf32, #tpu.memory_space<vmem>>) attributes {dimension_semantics = [#tpu.dimension_semantics<parallel>, #tpu.dimension_semantics<parallel>], iteration_bounds = array<i64: 1, 1>, scalar_prefetch = 0 : i64, scratch_operands = 0 : i64, tpu.core_type = #tpu.core_type<tc>, window_params = [{transform_indices = @transform_0, window_bounds = array<i64: 1, 1>}, {transform_indices = @transform_1, window_bounds = array<i64: 16, 128>}, {transform_indices = @transform_2, window_bounds = array<i64: 16, 128>}]} {
    %c0 = arith.constant 0 : index
    %c0_0 = arith.constant 0 : index
    %0 = memref.load %arg2[%c0, %c0_0] : memref<1x1xf32, #tpu.memory_space<smem>>
    %cst = arith.constant 0.000000e+00 : f32
    %1 = arith.subf %cst, %0 : f32
    %c0_1 = arith.constant 0 : index
    %c0_2 = arith.constant 0 : index
    %2 = vector.load %arg3[%c0_1, %c0_2] : memref<16x128xf32, #tpu.memory_space<vmem>>, vector<16x128xf32>
    %3 = vector.broadcast %1 : f32 to vector<16x128xf32>
    %4 = arith.mulf %3, %2 : vector<16x128xf32>
    %5 = math.exp %4 : vector<16x128xf32>
    %c0_3 = arith.constant 0 : index
    %c0_4 = arith.constant 0 : index
    %6 = vector.load %arg4[%c0_3, %c0_4] : memref<16x128xf32, #tpu.memory_space<vmem>>, vector<16x128xf32>
    tpu.vector_store %arg4[%c0_3, %c0_4], %5 {strides = array<i32>} : memref<16x128xf32, #tpu.memory_space<vmem>>, vector<16x128xf32>,
    return
  }
  func.func @transform_0(%arg0: i32, %arg1: i32) -> (i32, i32) {
    %c0_i32 = arith.constant 0 : i32
    %c0_i32_0 = arith.constant 0 : i32
    %c0_i32_1 = arith.constant 0 : i32
    return %c0_i32, %c0_i32_0 : i32, i32
  }
  func.func @transform_1(%arg0: i32, %arg1: i32) -> (i32, i32) {
    %c0_i32 = arith.constant 0 : i32
    return %arg0, %arg1 : i32, i32
  }
  func.func @transform_2(%arg0: i32, %arg1: i32) -> (i32, i32) {
    %c0_i32 = arith.constant 0 : i32
    return %arg0, %arg1 : i32, i32
  }
}

</mosaic_0001>

<llo_original>
// kernel: _rbf_median_sigma.2
$region0: #{_rbf_median_sigma.2}
  #allocation0 [shape = 'u32[]', space=smem, size = 0x4, offset = 0x4, fixed_abs, tag = 'smem constant byte address 0x4 - core index']
  #allocation1 [shape = 'u32[144,128]{1,0:T(1,128)}', space=vmem, size = 0x12000, scoped, tag = 'internal scratch']
  %s0 = inlined_call_operand.vmem [shape: f32[16,32], index: 0, kind: input, shape index: {}]
  %s1 = inlined_call_operand.vmem [shape: f32[32,16], index: 1, kind: input, shape index: {}]
  %s2 = inlined_call_operand.vmem [shape: f32[16,1], index: 2, kind: input, shape index: {}]
  %s3 = inlined_call_operand.vmem [shape: f32[1,16], index: 3, kind: input, shape index: {}]
  %s4 = inlined_call_operand.vmem [shape: f32[16,16], index: 4, kind: output, shape index: {}]
  %s5 = sld [smem:[#allocation0]]
  $region49: #{_rbf_median_sigma.2} parent=0
    _
  %s7 = ssub.s32 1, %s5
  %s8 = scalar_select 0, %s7, %s5
  loop: start=0, step=1, limit=4
  $region2: #{_rbf_median_sigma.2} parent=0 // loop_pre_header
    _
  $region3: #{_rbf_median_sigma.2} parent=0 // loop_header
    %s10 = sphi 0, %s14
    %p11 = scmp.ge.s32.totalorder %s10, 4
    %s17 = sphi 0, %s29
    %s18 = sphi 0, %s25
    %s19 = sphi 0, %s17
    %s20 = sphi 0, %s18
    %s21 = sphi 0, %s19
    %s22 = sphi 0, %s20
    %s32 = sphi 0, %s34
    %s35 = sphi 0, %s32
    %s36 = sphi 0, %s35
    %s52 = sphi 0, %s36
    %s58 = sphi 0, %s60
    %s61 = sphi 0, %s58
    %s62 = sphi 0, %s61
    %s78 = sphi 0, %s62
    %s84 = sphi 0, %s86
    %s87 = sphi 0, %s84
    %s88 = sphi 0, %s87
    %s104 = sphi 0, %s88
    %s110 = sphi 0, %s112
    %s113 = sphi 0, %s110
    %s114 = sphi 0, %s113
    %s130 = sphi 0, %s114
    %s138 = sphi 0, %s140
    %s141 = sphi 0, %s138
    %s142 = sphi 0, %s141
    %s158 = sphi 0, %s142
  $region4: #{_rbf_median_sigma.2} parent=0 // loop_header_branch
    %13 = sbr.rel (%p11) target = $region8
  $region5: #{_rbf_median_sigma.2} parent=0 // loop_body
    %s15 = ssub.s32 %s10, 1
    %s16 = ssub.s32 %s10, 2
    %s23 = sadd.s32 1, %s18
    %p24 = scmp.ge.s32.totalorder %s23, 2
    %s25 = scalar_select %p24, 0, %s23
    %s26 = sadd.s32 1, %s17
    %s27 = scalar_select %p24, %s26, %s17
    %p28 = scmp.ge.s32.totalorder %s27, 1
    %s29 = scalar_select %p28, 0, %s27
    %s30 = ssub.s32 %s18, %s25
    %p31 = scmp.eq.s32.totalorder %s30, 0
    %s33 = sadd.s32 %s32, 1
    %s34 = scalar_select %p31, %s32, %s33
    %p37 = pneg %p31
    %p38 = scmp.eq.s32.totalorder %s10, 1
    %p39 = por %p37, %p38
    %p40 = scmp.ne.s32.totalorder %s32, %s35
    %p41 = scmp.eq.s32.totalorder %s10, 0
    %p42 = por %p40, %p41
    %p43 = scmp.ne.s32.totalorder %s32, %s35
    %p44 = scmp.eq.s32.totalorder %s15, 1
    %p45 = por %p43, %p44
    %p46 = scmp.ne.s32.totalorder %s35, %s36
    %p47 = scmp.eq.s32.totalorder %s15, 0
    %p48 = por %p46, %p47
    %p49 = scmp.ne.s32.totalorder %s35, %s36
    %p50 = scmp.eq.s32.totalorder %s16, 1
    %p51 = por %p49, %p50
    %p53 = scmp.ne.s32.totalorder %s36, %s52
    %p54 = scmp.eq.s32.totalorder %s16, 0
    %p55 = por %p53, %p54
    %s56 = ssub.s32 %s17, %s29
    %p57 = scmp.eq.s32.totalorder %s56, 0
    %s59 = sadd.s32 %s58, 1
    %s60 = scalar_select %p57, %s58, %s59
    %p63 = pneg %p57
    %p64 = scmp.eq.s32.totalorder %s10, 1
    %p65 = por %p63, %p64
    %p66 = scmp.ne.s32.totalorder %s58, %s61
    %p67 = scmp.eq.s32.totalorder %s10, 0
    %p68 = por %p66, %p67
    %p69 = scmp.ne.s32.totalorder %s58, %s61
    %p70 = scmp.eq.s32.totalorder %s15, 1
    %p71 = por %p69, %p70
    %p72 = scmp.ne.s32.totalorder %s61, %s62
    %p73 = scmp.eq.s32.totalorder %s15, 0
    %p74 = por %p72, %p73
    %p75 = scmp.ne.s32.totalorder %s61, %s62
    %p76 = scmp.eq.s32.totalorder %s16, 1
    %p77 = por %p75, %p76
    %p79 = scmp.ne.s32.totalorder %s62, %s78
    %p80 = scmp.eq.s32.totalorder %s16, 0
    %p81 = por %p79, %p80
    %s82 = ssub.s32 %s18, %s25
    %p83 = scmp.eq.s32.totalorder %s82, 0
    %s85 = sadd.s32 %s84, 1
    %s86 = scalar_select %p83, %s84, %s85
    %p89 = pneg %p83
    %p90 = scmp.eq.s32.totalorder %s10, 1
    %p91 = por %p89, %p90
    %p92 = scmp.ne.s32.totalorder %s84, %s87
    %p93 = scmp.eq.s32.totalorder %s10, 0
    %p94 = por %p92, %p93
    %p95 = scmp.ne.s32.totalorder %s84, %s87
    %p96 = scmp.eq.s32.totalorder %s15, 1
    %p97 = por %p95, %p96
    %p98 = scmp.ne.s32.totalorder %s87, %s88
    %p99 = scmp.eq.s32.totalorder %s15, 0
    %p100 = por %p98, %p99
    %p101 = scmp.ne.s32.totalorder %s87, %s88
    %p102 = scmp.eq.s32.totalorder %s16, 1
    %p103 = por %p101, %p102
    %p105 = scmp.ne.s32.totalorder %s88, %s104
    %p106 = scmp.eq.s32.totalorder %s16, 0
    %p107 = por %p105, %p106
    %s108 = ssub.s32 %s17, %s29
    %p109 = scmp.eq.s32.totalorder %s108, 0
    %s111 = sadd.s32 %s110, 1
    %s112 = scalar_select %p109, %s110, %s111
    %p115 = pneg %p109
    %p116 = scmp.eq.s32.totalorder %s10, 1
    %p117 = por %p115, %p116
    %p118 = scmp.ne.s32.totalorder %s110, %s113
    %p119 = scmp.eq.s32.totalorder %s10, 0
    %p120 = por %p118, %p119
    %p121 = scmp.ne.s32.totalorder %s110, %s113
    %p122 = scmp.eq.s32.totalorder %s15, 1
    %p123 = por %p121, %p122
    %p124 = scmp.ne.s32.totalorder %s113, %s114
    %p125 = scmp.eq.s32.totalorder %s15, 0
    %p126 = por %p124, %p125
    %p127 = scmp.ne.s32.totalorder %s113, %s114
    %p128 = scmp.eq.s32.totalorder %s16, 1
    %p129 = por %p127, %p128
    %p131 = scmp.ne.s32.totalorder %s114, %s130
    %p132 = scmp.eq.s32.totalorder %s16, 0
    %p133 = por %p131, %p132
    %s134 = ssub.s32 %s18, %s25
    %s135 = ssub.s32 %s17, %s29
    %s136 = sor.u32 %s134, %s135
    %p137 = scmp.eq.s32.totalorder %s136, 0
    %s139 = sadd.s32 %s138, 1
    %s140 = scalar_select %p137, %s138, %s139
    %p143 = pneg %p137
    %p144 = scmp.eq.s32.totalorder %s10, 1
    %p145 = por %p143, %p144
    %p146 = scmp.ne.s32.totalorder %s138, %s141
    %p147 = scmp.eq.s32.totalorder %s10, 0
    %p148 = por %p146, %p147
    %p149 = scmp.ne.s32.totalorder %s138, %s141
    %p150 = scmp.eq.s32.totalorder %s15, 1
    %p151 = por %p149, %p150
    %p152 = scmp.ne.s32.totalorder %s141, %s142
    %p153 = scmp.eq.s32.totalorder %s15, 0
    %p154 = por %p152, %p153
    %p155 = scmp.ne.s32.totalorder %s141, %s142
    %p156 = scmp.eq.s32.totalorder %s16, 1
    %p157 = por %p155, %p156
    %p159 = scmp.ne.s32.totalorder %s142, %s158
    %p160 = scmp.eq.s32.totalorder %s16, 0
    %p161 = por %p159, %p160
    %p162 = scmp.le.s32.totalorder 1, %s10
    %p163 = scmp.lt.s32.totalorder %s10, 3
    %p164 = pnand %p162, %p163
    %p165 = pneg %p164
    // Predicated region
    $region9: #{_rbf_median_sigma.2} parent=5 // pred_check
      _
    $region10: #{_rbf_median_sigma.2} parent=5 // pred_check_branch
      %167 = sbr.rel (%p164) target = $region12
    $region11: #{_rbf_median_sigma.2} parent=5 // pred_region
      %s168 = ssub.s32 %s10, 1
      // Predicated region
      $region13: #{_rbf_median_sigma.2} parent=11 // pred_check
        %p169 = pneg %p74
      $region14: #{_rbf_median_sigma.2} parent=11 // pred_check_branch
        %171 = sbr.rel (%p169) target = $region16
      $region15: #{_rbf_median_sigma.2} parent=11 // pred_region
        %p172 = scmp.lt.s32.totalorder %s19, 0
        %s173 = scalar_select %p172, %s19, 0
        %s174 = smul.addr %s173, 8
        %s175 = scalar_lea.vmem %s1, %s174
      $region16: #{_rbf_median_sigma.2} parent=11 // pred_fallthru
        _
      // Predicated region
      $region17: #{_rbf_median_sigma.2} parent=11 // pred_check
        %p176 = pneg %p126
      $region18: #{_rbf_median_sigma.2} parent=11 // pred_check_branch
        %178 = sbr.rel (%p176) target = $region20
      $region19: #{_rbf_median_sigma.2} parent=11 // pred_region
        %p179 = scmp.lt.s32.totalorder %s19, 0
        %s180 = scalar_select %p179, %s19, 0
        %s181 = scalar_lea.vmem %s3, %s180
      $region20: #{_rbf_median_sigma.2} parent=11 // pred_fallthru
        _
    $region12: #{_rbf_median_sigma.2} parent=5 // pred_fallthru
      _
    %p182 = scmp.lt.s32.totalorder %s10, 2
    // Predicated region
    $region21: #{_rbf_median_sigma.2} parent=5 // pred_check
      %p183 = pneg %p182
    $region22: #{_rbf_median_sigma.2} parent=5 // pred_check_branch
      %185 = sbr.rel (%p183) target = $region24
    $region23: #{_rbf_median_sigma.2} parent=5 // pred_region
      // Predicated region
      $region25: #{_rbf_median_sigma.2} parent=23 // pred_check
        %p186 = pneg %p42
      $region26: #{_rbf_median_sigma.2} parent=23 // pred_check_branch
        %188 = sbr.rel (%p186) target = $region28
      $region27: #{_rbf_median_sigma.2} parent=23 // pred_region
        %p189 = scmp.lt.s32.totalorder %s18, 1
        %s190 = scalar_select %p189, %s18, 1
        %s191 = smul.addr %s190, 8
        %s192 = scalar_lea.vmem %s0, %s191
      $region28: #{_rbf_median_sigma.2} parent=23 // pred_fallthru
        _
      // Predicated region
      $region29: #{_rbf_median_sigma.2} parent=23 // pred_check
        %p193 = pneg %p94
      $region30: #{_rbf_median_sigma.2} parent=23 // pred_check_branch
        %195 = sbr.rel (%p193) target = $region32
      $region31: #{_rbf_median_sigma.2} parent=23 // pred_region
        %p196 = scmp.lt.s32.totalorder %s18, 1
        %s197 = scalar_select %p196, %s18, 1
        %s198 = smul.addr %s197, 8
        %s199 = scalar_lea.vmem %s2, %s198
      $region32: #{_rbf_median_sigma.2} parent=23 // pred_fallthru
        _
    $region24: #{_rbf_median_sigma.2} parent=5 // pred_fallthru
      _
    %p200 = scmp.le.s32.totalorder 1, %s10
    %p201 = scmp.lt.s32.totalorder %s10, 3
    %p202 = pnand %p200, %p201
    %p203 = pneg %p202
    // Predicated region
    $region33: #{_rbf_median_sigma.2} parent=5 // pred_check
      _
    $region34: #{_rbf_median_sigma.2} parent=5 // pred_check_branch
      %205 = sbr.rel (%p202) target = $region36
    $region35: #{_rbf_median_sigma.2} parent=5 // pred_region
      %s206 = ssub.s32 %s10, 1
      %p207 = scmp.lt.s32.totalorder %s20, 1
      %s208 = scalar_select %p207, %s20, 1
      %s209 = smul.addr %s208, 8
      %s210 = scalar_lea.vmem %s0, %s209
      %p211 = pneg %p48
      %p212 = pneg %p45
      %p213 = scmp.lt.s32.totalorder %s19, 0
      %s214 = scalar_select %p213, %s19, 0
      %s215 = smul.addr %s214, 8
      %s216 = scalar_lea.vmem %s1, %s215
      %p217 = pneg %p74
      %p218 = pneg %p71
      %p219 = scmp.lt.s32.totalorder %s20, 1
      %s220 = scalar_select %p219, %s20, 1
      %s221 = smul.addr %s220, 8
      %s222 = scalar_lea.vmem %s2, %s221
      %p223 = pneg %p100
      %p224 = pneg %p97
      %p225 = scmp.lt.s32.totalorder %s19, 0
      %s226 = scalar_select %p225, %s19, 0
      %s227 = scalar_lea.vmem %s3, %s226
      %p228 = pneg %p126
      %p229 = pneg %p123
      %p230 = pneg %p154
      %p231 = pneg %p151
      %p232 = scmp.lt.s32.totalorder %s20, 1
      %s233 = scalar_select %p232, %s20, 1
      %p234 = scmp.lt.s32.totalorder %s19, 0
      %s235 = scalar_select %p234, %s19, 0
      %s236 = sadd.s32 %s235, %s233
      %s237 = smul.addr %s236, 8
      %s238 = scalar_lea.vmem %s4, %s237
      %p239 = scmp.lt.s32.totalorder %s20, 1
      %s240 = scalar_select %p239, %s20, 1
      %s241 = smul.addr %s240, 8
      %s242 = scalar_lea.vmem %s0, %s241
      %p243 = scmp.lt.s32.totalorder %s19, 0
      %s244 = scalar_select %p243, %s19, 0
      %s245 = smul.addr %s244, 8
      %s246 = scalar_lea.vmem %s1, %s245
      %p247 = scmp.lt.s32.totalorder %s20, 1
      %s248 = scalar_select %p247, %s20, 1
      %s249 = smul.addr %s248, 8
      %s250 = scalar_lea.vmem %s2, %s249
      %p251 = scmp.lt.s32.totalorder %s19, 0
      %s252 = scalar_select %p251, %s19, 0
      %s253 = scalar_lea.vmem %s3, %s252
      %p254 = scmp.lt.s32.totalorder %s20, 1
      %s255 = scalar_select %p254, %s20, 1
      %p256 = scmp.lt.s32.totalorder %s19, 0
      %s257 = scalar_select %p256, %s19, 0
      %s258 = sadd.s32 %s257, %s255
      %s259 = smul.addr %s258, 8
      %s260 = scalar_lea.vmem %s4, %s259
      %v261 = vld [vmem:[%s242] sm:$0xff]
      %v262 = vld [vmem:[%s246] sm:$0xff]
      %v263 = vld [vmem:[%s246 + $0x8] sm:$0xff]
      %v264 = vld [vmem:[%s246 + $0x10] sm:$0xff]
      %v265 = vld [vmem:[%s246 + $0x18] sm:$0xff]
      %vm266 = vcmask 261120
      %v268 = vsel %vm266, %v261, 0
      %270 = vmatprep.subr.mxu0 0.0
      %271 = vmatpush1.msra.mxu0 %v262
      %272 = vmatprep.subr.mxu0 0.0
      %273 = vmatpush1.msra.mxu0 %v263
      %274 = vmatprep.subr.mxu0 0.0
      %275 = vmatpush1.msra.mxu0 %v264
      %276 = vmatprep.subr.mxu0 0.0
      %277 = vmatpush1.msra.mxu0 %v265
      %278 = vmatprep.subr.mxu0 0.0
      %279 = vmatpush1.msra.mxu0 0.0
      %280 = vmatprep.subr.mxu0 0.0
      %281 = vmatpush1.msra.mxu0 0.0
      %282 = vmatprep.subr.mxu0 0.0
      %283 = vmatpush1.msra.mxu0 0.0
      %284 = vmatprep.subr.mxu0 0.0
      %285 = vmatpush1.msra.mxu0 0.0
      %286 = vmatprep.subr.mxu0 0.0
      %287 = vmatpush1.msra.mxu0 0.0
      %288 = vmatprep.subr.mxu0 0.0
      %289 = vmatpush1.msra.mxu0 0.0
      %290 = vmatprep.subr.mxu0 0.0
      %291 = vmatpush1.msra.mxu0 0.0
      %292 = vmatprep.subr.mxu0 0.0
      %293 = vmatpush1.msra.mxu0 0.0
      %294 = vmatprep.subr.mxu0 0.0
      %295 = vmatpush1.msra.mxu0 0.0
      %296 = vmatprep.subr.mxu0 0.0
      %297 = vmatpush1.msra.mxu0 0.0
      %298 = vmatprep.subr.mxu0 0.0
      %299 = vmatpush1.msra.mxu0 0.0
      %300 = vmatprep.subr.mxu0 0.0
      %301 = vmatpush1.msra.mxu0 0.0
      %302 = vmatprep.subr.mxu0 0.0
      %303 = vmatpush1.msra.mxu0 0.0
      %304 = vmatprep.subr.mxu0 0.0
      %305 = vmatpush1.msra.mxu0 0.0
      %306 = vmatprep.subr.mxu0 0.0
      %307 = vmatpush1.msra.mxu0 0.0
      %308 = vmatprep.subr.mxu0 0.0
      %309 = vmatpush1.msra.mxu0 0.0
      %310 = vmatprep.subr.mxu0 0.0
      %311 = vmatpush1.msra.mxu0 0.0
      %312 = vmatprep.subr.mxu0 0.0
      %313 = vmatpush1.msra.mxu0 0.0
      %314 = vmatprep.subr.mxu0 0.0
      %315 = vmatpush1.msra.mxu0 0.0
      %316 = vmatprep.subr.mxu0 0.0
      %317 = vmatpush1.msra.mxu0 0.0
      %318 = vmatprep.subr.mxu0 0.0
      %319 = vmatpush1.msra.mxu0 0.0
      %320 = vmatprep.subr.mxu0 0.0
      %321 = vmatpush1.msra.mxu0 0.0
      %322 = vmatprep.subr.mxu0 0.0
      %323 = vmatpush1.msra.mxu0 0.0
      %324 = vmatprep.subr.mxu0 0.0
      %325 = vmatpush1.msra.mxu0 0.0
      %326 = vmatprep.subr.mxu0 0.0
      %327 = vmatpush1.msra.mxu0 0.0
      %328 = vmatprep.subr.mxu0 0.0
      %329 = vmatpush1.msra.mxu0 0.0
      %330 = vmatprep.subr.mxu0 0.0
      %331 = vmatpush1.msra.mxu0 0.0
      %332 = vmatprep.subr.mxu0 0.0
      %333 = vmatpush1.msra.mxu0 0.0
      %334 = vmatprep.mubr.f32.mxu0 0.0
      %335 = vmatmul.mubr.f32.gmra.mrb[0].mxu0 %v268
      %v336 = vpop.f32.mrb[0].mxu0
      %v337 = vadd.f32 0.0, %v336
      %v338 = vpop.f32.mrb[0].mxu0
      %339 = vdwg.mxu0
      %v340 = vld [vmem:[%s250] sm:$0xff]
      %v341 = vld [vmem:[%s253] sm:$0x1]
      %343 = vset.pattern.permute.xlu0 0
      %344 = vperm.xlu0 %343, %v340
      %v345 = vpop.permute.xlu0 %344
      %v348 = vlaneseq
      %v349 = vshrl.u32 %v348, 7
      %v350 = vsub.s32 0, %v349
      %v351 = vrot.slane %v341, %v350
      %v353 = vadd.f32 %v345, %v351
      %v354 = vmul.f32 %v337, 2.0
      %v355 = vsub.f32 %v353, %v354
      %356 = vst [vmem:[%s260] sm:$0xff] %v355
      %p357 = scmp.lt.s32.totalorder %s20, 1
      %s358 = scalar_select %p357, %s20, 1
      %p359 = scmp.lt.s32.totalorder %s19, 0
      %s360 = scalar_select %p359, %s19, 0
      %s361 = sadd.s32 %s360, %s358
      %s362 = smul.addr %s361, 8
      %s363 = scalar_lea.vmem %s4, %s362
      // Predicated region
      $region37: #{_rbf_median_sigma.2} parent=35 // pred_check
        %p364 = pneg %p151
      $region38: #{_rbf_median_sigma.2} parent=35 // pred_check_branch
        %366 = sbr.rel (%p364) target = $region40
      $region39: #{_rbf_median_sigma.2} parent=35 // pred_region
        _
      $region40: #{_rbf_median_sigma.2} parent=35 // pred_fallthru
        _
    $region36: #{_rbf_median_sigma.2} parent=5 // pred_fallthru
      _
    %p367 = scmp.le.s32.totalorder 2, %s10
    // Predicated region
    $region41: #{_rbf_median_sigma.2} parent=5 // pred_check
      %p368 = pneg %p367
    $region42: #{_rbf_median_sigma.2} parent=5 // pred_check_branch
      %370 = sbr.rel (%p368) target = $region44
    $region43: #{_rbf_median_sigma.2} parent=5 // pred_region
      %s371 = ssub.s32 %s10, 2
      // Predicated region
      $region45: #{_rbf_median_sigma.2} parent=43 // pred_check
        %p372 = pneg %p157
      $region46: #{_rbf_median_sigma.2} parent=43 // pred_check_branch
        %374 = sbr.rel (%p372) target = $region48
      $region47: #{_rbf_median_sigma.2} parent=43 // pred_region
        %p375 = scmp.lt.s32.totalorder %s22, 1
        %s376 = scalar_select %p375, %s22, 1
        %p377 = scmp.lt.s32.totalorder %s21, 0
        %s378 = scalar_select %p377, %s21, 0
        %s379 = sadd.s32 %s378, %s376
        %s380 = smul.addr %s379, 8
        %s381 = scalar_lea.vmem %s4, %s380
      $region48: #{_rbf_median_sigma.2} parent=43 // pred_fallthru
        _
    $region44: #{_rbf_median_sigma.2} parent=5 // pred_fallthru
      _
  $region6: #{_rbf_median_sigma.2} parent=0 // loop_footer
    %s14 = sadd.s32 1, %s10
  $region7: #{_rbf_median_sigma.2} parent=0 // loop_footer_branch
    %9 = sbr.rel target = $region3
  $region8: #{_rbf_median_sigma.2} parent=0 // loop_exit
    _

// kernel: _rbf_median_sigma.3
$region0: #{_rbf_median_sigma.3}
  #allocation0 [shape = 'u32[]', space=smem, size = 0x4, offset = 0x4, fixed_abs, tag = 'smem constant byte address 0x4 - core index']
  #allocation1 [shape = 'u32[144,128]{1,0:T(1,128)}', space=vmem, size = 0x12000, scoped, tag = 'internal scratch']
  #allocation2 [shape = 'f32[1,1]{1,0:T(1,128)S(6)}', space=smem, size = 0x200, scoped, tag = 'scoped memory for _rbf_median_sigma.3']
  %s0 = inlined_call_operand.<no memory space> [shape: f32[1,1], index: 0, kind: input, shape index: {}]
  %s1 = inlined_call_operand.hbm [shape: f32[16,16], index: 1, kind: input, shape index: {}, may-alias: {1,2}]
  %s2 = inlined_call_operand.hbm [shape: f32[16,16], index: 2, kind: output, shape index: {}, may-alias: {1,2}]
  %s3 = sld [smem:[#allocation0]]
  $region22: #{_rbf_median_sigma.3} parent=0
    _
  %s5 = ssub.s32 1, %s3
  %s6 = scalar_select 0, %s5, %s3
  %7 = sst [smem:[#allocation2]] %s0
  $region1: #{_rbf_median_sigma.3} parent=0
    #allocation3 [shape = 'u8[8192]{0}', space=vmem, size = 0x2000, scoped, tag = 'input window, operand 1, single buffered']
    #allocation4 [shape = 's32[1]{0}', space=sflag, size = 0x4, scoped, tag = 'scoped memory for _rbf_median_sigma.3']
    #allocation5 [shape = 's32[1]{0}', space=sflag, size = 0x4, scoped, tag = 'scoped memory for _rbf_median_sigma.3']
    #allocation6 [shape = 'u8[8192]{0}', space=vmem, size = 0x2000, scoped, tag = 'output window, operand 0, single buffered']
    %8 = vsyncpa [#allocation4], 0
    %9 = vsyncpa [#allocation5], 0
    // Predicated region
    $region2: #{_rbf_median_sigma.3} parent=1 // pred_check
      _
    $region3: #{_rbf_median_sigma.3} parent=1 // pred_check_branch
      %11 = sbr.rel (0) target = $region5
    $region4: #{_rbf_median_sigma.3} parent=1 // pred_region
      _
    $region5: #{_rbf_median_sigma.3} parent=1 // pred_fallthru
      _
    // Predicated region
    $region6: #{_rbf_median_sigma.3} parent=1 // pred_check
      _
    $region7: #{_rbf_median_sigma.3} parent=1 // pred_check_branch
      %13 = sbr.rel (0) target = $region9
    $region8: #{_rbf_median_sigma.3} parent=1 // pred_region
      %s15 = ssub.s32 256, 256
      %16 = vsyncadd [#allocation4], %s15
      %s17 = sshll.u32 [#allocation3], 4
      %s18 = int_to_ptr.vmem [resolvable:$true] %s17
      %23 = dma.hbm_to_vmem [thread:$0]  %s1, 256, %s18, [#allocation4], 128, 128, 8
    $region9: #{_rbf_median_sigma.3} parent=1 // pred_fallthru
      _
    // Predicated region
    $region10: #{_rbf_median_sigma.3} parent=1 // pred_check
      _
    $region11: #{_rbf_median_sigma.3} parent=1 // pred_check_branch
      %25 = sbr.rel (0) target = $region13
    $region12: #{_rbf_median_sigma.3} parent=1 // pred_region
      %26 = dma.done [#allocation4], 256
    $region13: #{_rbf_median_sigma.3} parent=1 // pred_fallthru
      _
    %s27 = sld [smem:[#allocation2]]
    %s28 = ssub.f32 0.0, %s27
    %v29 = vld [vmem:[#allocation3] sm:$0xff]
    %v30 = vld [vmem:[#allocation3 + $0x8] sm:$0xff]
    %v31 = vstv %s28
    %v32 = vmul.f32 %v31, %v29
    %v33 = vmul.f32 %v31, %v30
    %v34 = vmul.f32 %v32, 1.442695
    %v35 = vpow.pop %v34
    %v36 = vmul.f32 %v33, 1.442695
    %v37 = vpow.pop %v36
    %38 = vst [vmem:[#allocation6] sm:$0xff] %v35
    %39 = vst [vmem:[#allocation6 + $0x8] sm:$0xff] %v37
    // Predicated region
    $region14: #{_rbf_median_sigma.3} parent=1 // pred_check
      _
    $region15: #{_rbf_median_sigma.3} parent=1 // pred_check_branch
      %41 = sbr.rel (0) target = $region17
    $region16: #{_rbf_median_sigma.3} parent=1 // pred_region
      %s43 = ssub.s32 256, 256
      %44 = vsyncadd [#allocation5], %s43
      %s45 = sshll.u32 [#allocation6], 4
      %s46 = int_to_ptr.vmem [resolvable:$true] %s45
      %51 = dma.vmem_to_hbm [thread:$0]  %s46, 256, %s2, [#allocation5], 128, 128, 8
    $region17: #{_rbf_median_sigma.3} parent=1 // pred_fallthru
      _
    // Predicated region
    $region18: #{_rbf_median_sigma.3} parent=1 // pred_check
      _
    $region19: #{_rbf_median_sigma.3} parent=1 // pred_check_branch
      %53 = sbr.rel (0) target = $region21
    $region20: #{_rbf_median_sigma.3} parent=1 // pred_region
      %54 = dma.done [#allocation5], 256
    $region21: #{_rbf_median_sigma.3} parent=1 // pred_fallthru
      _
    %55 = vsyncpa [#allocation4], 1
    %56 = vsyncpa [#allocation5], 1

</llo_original>
